<compile_context>
chip_gen: v6e
topology: v6e:2x2x1
jax: 0.10.0
libtpu: 0.0.40
codegen_flags: <defaults>
</compile_context>

<pallas_src>
import functools

import jax
import jax.numpy as jnp
from jax import lax
from jax.experimental import pallas as pl
from jax.experimental.pallas import tpu as pltpu


# ----------------------------------------------------------------------------
# l2norm: X * rsqrt(sum(X^2, -1, keepdims=True))
# ----------------------------------------------------------------------------
def _l2norm_kernel(x_ref, o_ref):
    x = x_ref[...].astype(jnp.float32)
    inv = lax.rsqrt(jnp.sum(x * x, axis=-1, keepdims=True))   # EUP rsqrt
    o_ref[...] = (x * inv).astype(o_ref.dtype)


def _pick_row_tile(m, d, itemsize, budget_bytes=16 * 1024 * 1024):
    # (in + out) x 2 pipeline buffers x tile_rows x d x itemsize <= budget,
    # budget chosen to leave headroom under v7x's 32 MiB default scoped VMEM.
    per_row = 2 * 2 * d * itemsize
    tm = max(8, min(1024, budget_bytes // max(per_row, 1)))
    tm = (tm // 8) * 8
    return m if tm >= m else tm


def l2norm(x, *, block_rows=None):
    """L2-normalize along the last dim. Accepts any leading shape."""
    orig_shape = x.shape
    d = orig_shape[-1]
    x2 = x.reshape(-1, d)                  # keep storage dtype in HBM
    m = x2.shape[0]

    tm = block_rows if block_rows is not None else _pick_row_tile(
        m, d, jnp.dtype(x.dtype).itemsize)
    tm = min(tm, m)
    if tm < m:
        tm = max(8, (tm // 8) * 8)          # sublane alignment for tiled case

    out = pl.pallas_call(
        _l2norm_kernel,
        out_shape=jax.ShapeDtypeStruct((m, d), x.dtype),
        grid=(pl.cdiv(m, tm),),
        in_specs=[pl.BlockSpec((tm, d), lambda i: (i, 0))],
        out_specs=pl.BlockSpec((tm, d), lambda i: (i, 0)),
        compiler_params=pltpu.CompilerParams(
            dimension_semantics=("parallel",),
            vmem_limit_bytes=32 * 1024 * 1024),
    )(x2)
    return out.reshape(orig_shape)


# ----------------------------------------------------------------------------
# Fused loss + accuracy:
#   loss = mean_i [ (logsumexp(logits_i) - logits_i[label_i])
#                   * (S-1) / sum_j sim_ij ]
#   acc  = mean_i [ pred_i == label_i ]
# ----------------------------------------------------------------------------
def _loss_acc_kernel(logits_ref, label_ref, sim_ref, pred_ref,
                     loss_ref, acc_ref, acc_sc,
                     *, r_total, n_cls, s_sim, tr):
    i = pl.program_id(0)

    @pl.when(i == 0)
    def _init():
        acc_sc[0] = 0.0
        acc_sc[1] = 0.0

    logits = logits_ref[...].astype(jnp.float32)       # (TR, N)
    label = label_ref[...]                              # (TR, 1) int32
    sim = sim_ref[...].astype(jnp.float32)              # (TR, S)
    pred = pred_ref[...]                                 # (TR, 1) int32

    # Row-validity mask for the (possibly partial) last tile.
    rows = lax.broadcasted_iota(jnp.int32, (tr, 1), 0) + i * tr
    valid = rows < r_total                                # (TR, 1) bool

    # Stable log-sum-exp over classes; keep everything (TR, 1) / keepdims.
    m = jnp.max(logits, axis=-1, keepdims=True)
    lse = m + jnp.log(jnp.sum(jnp.exp(logits - m), axis=-1, keepdims=True))

    # Gather logits[r, label[r]] via one-hot compare (no dynamic gather on TPU).
    cols = lax.broadcasted_iota(jnp.int32, (tr, n_cls), 1)
    picked = jnp.sum(jnp.where(cols == label, logits, 0.0),
                     axis=-1, keepdims=True)

    ce = lse - picked                                     # (TR, 1)
    hie = jnp.sum(sim, axis=-1, keepdims=True) * jnp.float32(1.0 / (s_sim - 1))
    weighted = ce * pl.reciprocal(hie, approx=False)      # exact, keeps ref parity

    eq = (pred == label).astype(jnp.float32)              # (TR, 1)

    acc_sc[0] += jnp.sum(jnp.where(valid, weighted, 0.0))
    acc_sc[1] += jnp.sum(jnp.where(valid, eq, 0.0))

    @pl.when(i == pl.num_programs(0) - 1)
    def _finalize():
        inv_r = jnp.float32(1.0 / r_total)                # mean folded to constant
        loss_ref[0, 0] = acc_sc[0] * inv_r
        acc_ref[0, 0] = acc_sc[1] * inv_r


def fewshot_loss_and_accuracy(logits, label, sim, pred, *, block_rows=1024):
    """Fused FewShotREModel.loss(...) + FewShotREModel.accuracy(...)."""
    n = logits.shape[-1]
    s = sim.shape[-1]
    logits2 = logits.reshape(-1, n)
    label2 = label.reshape(-1, 1).astype(jnp.int32)
    sim2 = sim.reshape(-1, s)
    pred2 = pred.reshape(-1, 1).astype(jnp.int32)
    r = logits2.shape[0]

    tr = r if r <= block_rows else max(8, (block_rows // 8) * 8)

    kernel = functools.partial(_loss_acc_kernel,
                               r_total=r, n_cls=n, s_sim=s, tr=tr)
    loss, acc = pl.pallas_call(
        kernel,
        out_shape=(jax.ShapeDtypeStruct((1, 1), jnp.float32),
                   jax.ShapeDtypeStruct((1, 1), jnp.float32)),
        grid=(pl.cdiv(r, tr),),
        in_specs=[
            pl.BlockSpec((tr, n), lambda i: (i, 0)),
            pl.BlockSpec((tr, 1), lambda i: (i, 0)),
            pl.BlockSpec((tr, s), lambda i: (i, 0)),
            pl.BlockSpec((tr, 1), lambda i: (i, 0)),
        ],
        out_specs=(pl.BlockSpec(memory_space=pltpu.MemorySpace.SMEM),
                   pl.BlockSpec(memory_space=pltpu.MemorySpace.SMEM)),
        scratch_shapes=[pltpu.SMEM((2,), jnp.float32)],
        compiler_params=pltpu.CompilerParams(
            dimension_semantics=("arbitrary",)),
    )(logits2, label2, sim2, pred2)
    return loss[0, 0], acc[0, 0]


# TODO(synk): forward() is abstract in the PyTorch module (NotImplementedError);
#             only the concrete methods (l2norm / loss / accuracy) are kernelized.


if __name__ == "__main__":
    key = jax.random.PRNGKey(0)
    k1, k2, k3, k4, k5 = jax.random.split(key, 5)

    # Few-shot episode shapes: B=2 episodes, N=5 classes, K=2 shots,
    # total_Q=4 queries per episode, hidden=32.
    B, N, K, total_Q, D = 2, 5, 2, 4, 32
    R = B * total_Q                       # flattened query rows
    S = N + 1                             # sim vector length per row

    # Embeddings to normalize (support + query rows, per episode).
    emb = jax.random.normal(k1, (B, N * K + total_Q, D), dtype=jnp.float32)
    logits = jax.random.normal(k2, (B, total_Q, N), dtype=jnp.float32)
    label = jax.random.randint(k3, (B, total_Q), 0, N, dtype=jnp.int32)
    sim = jax.random.uniform(k4, (B, total_Q, S), dtype=jnp.float32,
                             minval=0.2, maxval=1.0)
    pred = jax.random.randint(k5, (R,), 0, N, dtype=jnp.int32)

    # --- Pallas kernels ---
    # block_rows=16 exercises the tiled/pipelined path (28 rows -> 2 tiles,
    # last tile partial) at this toy size; production uses the auto tile.
    emb_n = jax.block_until_ready(l2norm(emb, block_rows=16))
    loss_val, acc_val = fewshot_loss_and_accuracy(logits, label, sim, pred)
    loss_val = jax.block_until_ready(loss_val)
    acc_val = jax.block_until_ready(acc_val)

    # --- Pure-JAX references (sanity check) ---
    ref_norm = emb / jnp.sqrt(jnp.sum(emb ** 2, axis=-1, keepdims=True))
    lg = logits.reshape(-1, N)
    lb = label.reshape(-1)
    lse = jax.scipy.special.logsumexp(lg, axis=-1)
    ce = lse - lg[jnp.arange(R), lb]
    hie = sim.reshape(-1, S).sum(-1) / (S - 1)
    ref_loss = jnp.mean(ce / hie)
    ref_acc = jnp.mean((pred == label.reshape(-1)).astype(jnp.float32))

    assert jnp.allclose(emb_n, ref_norm, atol=1e-5, rtol=1e-4)
    assert jnp.allclose(loss_val, ref_loss, atol=1e-5, rtol=1e-4)
    assert jnp.allclose(acc_val, ref_acc, atol=1e-6)

    print("KERNEL_OK")
</pallas_src>

<mosaic_0001>
module attributes {stable_mosaic.version = 11 : i64} {
  func.func @_l2norm_kernel(%arg0: i32, %arg1: memref<16x32xf32, #tpu.memory_space<vmem>>, %arg2: memref<16x32xf32, #tpu.memory_space<vmem>>) attributes {dimension_semantics = [#tpu.dimension_semantics<parallel>], iteration_bounds = array<i64: 2>, scalar_prefetch = 0 : i64, scratch_operands = 0 : i64, tpu.core_type = #tpu.core_type<tc>, window_params = [{transform_indices = @transform_0, window_bounds = array<i64: 16, 32>}, {transform_indices = @transform_1, window_bounds = array<i64: 16, 32>}]} {
    %c0 = arith.constant 0 : index
    %c0_0 = arith.constant 0 : index
    %0 = vector.load %arg1[%c0, %c0_0] : memref<16x32xf32, #tpu.memory_space<vmem>>, vector<16x32xf32>
    %1 = arith.mulf %0, %0 : vector<16x32xf32>
    %cst = arith.constant dense<0.000000e+00> : vector<16xf32>
    %2 = vector.multi_reduction <add>, %1, %cst [1] : vector<16x32xf32> to vector<16xf32>
    %3 = vector.shape_cast %2 : vector<16xf32> to vector<16x1xf32>
    %4 = math.rsqrt %3 : vector<16x1xf32>
    %5 = vector.broadcast %4 : vector<16x1xf32> to vector<16x32xf32>
    %6 = arith.mulf %0, %5 : vector<16x32xf32>
    %c0_1 = arith.constant 0 : index
    %c0_2 = arith.constant 0 : index
    %7 = vector.load %arg2[%c0_1, %c0_2] : memref<16x32xf32, #tpu.memory_space<vmem>>, vector<16x32xf32>
    tpu.vector_store %arg2[%c0_1, %c0_2], %6 {strides = array<i32>} : memref<16x32xf32, #tpu.memory_space<vmem>>, vector<16x32xf32>,
    return
  }
  func.func @transform_0(%arg0: i32) -> (i32, i32) {
    %c0_i32 = arith.constant 0 : i32
    %c0_i32_0 = arith.constant 0 : i32
    return %arg0, %c0_i32 : i32, i32
  }
  func.func @transform_1(%arg0: i32) -> (i32, i32) {
    %c0_i32 = arith.constant 0 : i32
    %c0_i32_0 = arith.constant 0 : i32
    return %arg0, %c0_i32 : i32, i32
  }
}

</mosaic_0001>

<llo_original>
// kernel: tpu_custom_call.1
$region0: #{tpu_custom_call.1}
  #allocation0 [shape = 'u32[]', space=smem, size = 0x4, offset = 0x4, fixed_abs, tag = 'smem constant byte address 0x4 - core index']
  #allocation1 [shape = 'u32[144,128]{1,0:T(1,128)}', space=vmem, size = 0x12000, scoped, tag = 'internal scratch']
  %s0 = inlined_call_operand.hbm [shape: f32[28,32], index: 0, kind: input, shape index: {}]
  %s1 = inlined_call_operand.hbm [shape: f32[28,32], index: 1, kind: output, shape index: {}]
  %s2 = sld [smem:[#allocation0]]
  $region41: #{tpu_custom_call.1} parent=0
    _
  %s4 = ssub.s32 1, %s2
  %s5 = scalar_select 0, %s4, %s2
  $region1: #{tpu_custom_call.1} parent=0
    #allocation2 [shape = 'u8[16384]{0}', space=vmem, size = 0x4000, scoped, tag = 'input window, operand 0']
    #allocation3 [shape = 's32[2]{0}', space=sflag, size = 0x8, scoped, tag = 'scoped memory for tpu_custom_call.1']
    #allocation4 [shape = 's32[2]{0}', space=sflag, size = 0x8, scoped, tag = 'scoped memory for tpu_custom_call.1']
    #allocation5 [shape = 'u8[16384]{0}', space=vmem, size = 0x4000, scoped, tag = 'output window, operand 0']
    %6 = vsyncpa [#allocation3], 0
    %s7 = scalar_lea.sflag [#allocation3], 1
    %8 = vsyncpa %s7, 0
    %9 = vsyncpa [#allocation4], 0
    %s10 = scalar_lea.sflag [#allocation4], 1
    %11 = vsyncpa %s10, 0
    loop: start=0, step=1, limit=4
    $region2: #{tpu_custom_call.1} parent=1 // loop_pre_header
      _
    $region3: #{tpu_custom_call.1} parent=1 // loop_header
      %s13 = sphi 0, %s17
      %p14 = scmp.ge.s32.totalorder %s13, 4
      %s23 = sphi 0, %s25
      %s26 = sphi 0, %s23
      %s27 = sphi 0, %s26
      %s43 = sphi 0, %s27
      %s49 = sphi 0, %s51
      %s52 = sphi 0, %s49
      %s53 = sphi 0, %s52
      %s69 = sphi 0, %s53
    $region4: #{tpu_custom_call.1} parent=1 // loop_header_branch
      %16 = sbr.rel (%p14) target = $region8
    $region5: #{tpu_custom_call.1} parent=1 // loop_body
      %s18 = ssub.s32 %s13, 1
      %s19 = ssub.s32 %s13, 2
      %s20 = sadd.s32 %s13, 1
      %s21 = ssub.s32 %s13, %s20
      %p22 = scmp.eq.s32.totalorder %s21, 0
      %s24 = sadd.s32 %s23, 1
      %s25 = scalar_select %p22, %s23, %s24
      %p28 = pneg %p22
      %p29 = scmp.eq.s32.totalorder %s13, 1
      %p30 = por %p28, %p29
      %p31 = scmp.ne.s32.totalorder %s23, %s26
      %p32 = scmp.eq.s32.totalorder %s13, 0
      %p33 = por %p31, %p32
      %p34 = scmp.ne.s32.totalorder %s23, %s26
      %p35 = scmp.eq.s32.totalorder %s18, 1
      %p36 = por %p34, %p35
      %p37 = scmp.ne.s32.totalorder %s26, %s27
      %p38 = scmp.eq.s32.totalorder %s18, 0
      %p39 = por %p37, %p38
      %p40 = scmp.ne.s32.totalorder %s26, %s27
      %p41 = scmp.eq.s32.totalorder %s19, 1
      %p42 = por %p40, %p41
      %p44 = scmp.ne.s32.totalorder %s27, %s43
      %p45 = scmp.eq.s32.totalorder %s19, 0
      %p46 = por %p44, %p45
      %s47 = ssub.s32 %s13, %s20
      %p48 = scmp.eq.s32.totalorder %s47, 0
      %s50 = sadd.s32 %s49, 1
      %s51 = scalar_select %p48, %s49, %s50
      %p54 = pneg %p48
      %p55 = scmp.eq.s32.totalorder %s13, 1
      %p56 = por %p54, %p55
      %p57 = scmp.ne.s32.totalorder %s49, %s52
      %p58 = scmp.eq.s32.totalorder %s13, 0
      %p59 = por %p57, %p58
      %p60 = scmp.ne.s32.totalorder %s49, %s52
      %p61 = scmp.eq.s32.totalorder %s18, 1
      %p62 = por %p60, %p61
      %p63 = scmp.ne.s32.totalorder %s52, %s53
      %p64 = scmp.eq.s32.totalorder %s18, 0
      %p65 = por %p63, %p64
      %p66 = scmp.ne.s32.totalorder %s52, %s53
      %p67 = scmp.eq.s32.totalorder %s19, 1
      %p68 = por %p66, %p67
      %p70 = scmp.ne.s32.totalorder %s53, %s69
      %p71 = scmp.eq.s32.totalorder %s19, 0
      %p72 = por %p70, %p71
      %p73 = scmp.le.s32.totalorder 1, %s13
      %p74 = scmp.lt.s32.totalorder %s13, 3
      %p75 = pnand %p73, %p74
      %p76 = pneg %p75
      // Predicated region
      $region9: #{tpu_custom_call.1} parent=5 // pred_check
        _
      $region10: #{tpu_custom_call.1} parent=5 // pred_check_branch
        %78 = sbr.rel (%p75) target = $region12
      $region11: #{tpu_custom_call.1} parent=5 // pred_region
        %s79 = ssub.s32 %s13, 1
      $region12: #{tpu_custom_call.1} parent=5 // pred_fallthru
        _
      %p80 = scmp.lt.s32.totalorder %s13, 2
      // Predicated region
      $region13: #{tpu_custom_call.1} parent=5 // pred_check
        %p81 = pneg %p80
      $region14: #{tpu_custom_call.1} parent=5 // pred_check_branch
        %83 = sbr.rel (%p81) target = $region16
      $region15: #{tpu_custom_call.1} parent=5 // pred_region
        // Predicated region
        $region17: #{tpu_custom_call.1} parent=15 // pred_check
          %p84 = pneg %p33
        $region18: #{tpu_custom_call.1} parent=15 // pred_check_branch
          %86 = sbr.rel (%p84) target = $region20
        $region19: #{tpu_custom_call.1} parent=15 // pred_region
          %s87 = sand.u32 %s23, 1
          %s88 = scalar_lea.sflag [#allocation3], %s87
          %s89 = sand.u32 %s23, 1
          %s90 = smul.addr %s89, 16
          %s91 = scalar_lea.vmem [#allocation2], %s90
          %s92 = smul.u32 2, %s13
          %s94 = ssub.s32 256, 256
          %95 = vsyncadd %s88, %s94
          %s96 = smul.addr %s92, 128
          %s97 = scalar_lea.hbm %s0, %s96
          %s98 = sshll.u32 %s91, 4
          %s99 = int_to_ptr.vmem [resolvable:$true] %s98
          %104 = dma.hbm_to_vmem [thread:$0]  %s97, 256, %s99, %s88, 128, 128, 8
        $region20: #{tpu_custom_call.1} parent=15 // pred_fallthru
          _
      $region16: #{tpu_custom_call.1} parent=5 // pred_fallthru
        _
      %p105 = scmp.le.s32.totalorder 1, %s13
      %p106 = scmp.lt.s32.totalorder %s13, 3
      %p107 = pnand %p105, %p106
      %p108 = pneg %p107
      // Predicated region
      $region21: #{tpu_custom_call.1} parent=5 // pred_check
        _
      $region22: #{tpu_custom_call.1} parent=5 // pred_check_branch
        %110 = sbr.rel (%p107) target = $region24
      $region23: #{tpu_custom_call.1} parent=5 // pred_region
        %s111 = ssub.s32 %s13, 1
        %s112 = sand.u32 %s26, 1
        %s113 = scalar_lea.sflag [#allocation3], %s112
        %s114 = sand.u32 %s26, 1
        %s115 = smul.addr %s114, 16
        %s116 = scalar_lea.vmem [#allocation2], %s115
        // Predicated region
        $region25: #{tpu_custom_call.1} parent=23 // pred_check
          %p117 = pneg %p39
        $region26: #{tpu_custom_call.1} parent=23 // pred_check_branch
          %119 = sbr.rel (%p117) target = $region28
        $region27: #{tpu_custom_call.1} parent=23 // pred_region
          %120 = dma.done %s113, 256
        $region28: #{tpu_custom_call.1} parent=23 // pred_fallthru
          _
        %s121 = sand.u32 %s26, 1
        %s122 = scalar_lea.sflag [#allocation3], %s121
        %s123 = sand.u32 %s26, 1
        %s124 = smul.addr %s123, 16
        %s125 = scalar_lea.vmem [#allocation2], %s124
        %p126 = pneg %p39
        %p127 = pneg %p36
        %p128 = pneg %p65
        %p129 = pneg %p62
        %s130 = sand.u32 %s52, 1
        %s131 = scalar_lea.sflag [#allocation4], %s130
        %s132 = sand.u32 %s52, 1
        %s133 = smul.addr %s132, 16
        %s134 = scalar_lea.vmem [#allocation5], %s133
        %s135 = smul.u32 2, %s18
        %s136 = smul.u32 2, %s18
        %v137 = vld [vmem:[%s116] sm:$0xff]
        %v138 = vld [vmem:[%s116 + $0x8] sm:$0xff]
        %v139 = vmul.f32 %v137, %v137
        %v140 = vmul.f32 %v138, %v138
        %vm141 = vcmask 261120
        %v142 = vsel %vm141, %v139, 0.0
        %143 = vadd.xlane.f32.xlu0 %v142
        %v144 = vpop.xlane.xlu0 %143
        %v145 = vsel %vm141, %v140, 0.0
        %146 = vadd.xlane.f32.xlu0 %v145
        %v147 = vpop.xlane.xlu0 %146
        %v148 = vrsqrt.pop %v144
        %v149 = vrsqrt.pop %v147
        %v150 = vmul.f32 %v137, %v148
        %v151 = vmul.f32 %v138, %v149
        %152 = vst.msk [vmem:[%s134] sm:$0xff] %vm141, %v150
        %153 = vst.msk [vmem:[%s134 + $0x8] sm:$0xff] %vm141, %v151
        %s154 = sand.u32 %s52, 1
        %s155 = scalar_lea.sflag [#allocation4], %s154
        %s156 = sand.u32 %s52, 1
        %s157 = smul.addr %s156, 16
        %s158 = scalar_lea.vmem [#allocation5], %s157
        // Predicated region
        $region29: #{tpu_custom_call.1} parent=23 // pred_check
          %p159 = pneg %p62
        $region30: #{tpu_custom_call.1} parent=23 // pred_check_branch
          %161 = sbr.rel (%p159) target = $region32
        $region31: #{tpu_custom_call.1} parent=23 // pred_region
          %s162 = smul.u32 2, %s18
          %s164 = ssub.s32 256, 256
          %165 = vsyncadd %s155, %s164
          %s166 = smul.addr %s162, 128
          %s167 = scalar_lea.hbm %s1, %s166
          %s168 = sshll.u32 %s158, 4
          %s169 = int_to_ptr.vmem [resolvable:$true] %s168
          %174 = dma.vmem_to_hbm [thread:$0]  %s169, 256, %s167, %s155, 128, 128, 8
        $region32: #{tpu_custom_call.1} parent=23 // pred_fallthru
          _
      $region24: #{tpu_custom_call.1} parent=5 // pred_fallthru
        _
      %p175 = scmp.le.s32.totalorder 2, %s13
      // Predicated region
      $region33: #{tpu_custom_call.1} parent=5 // pred_check
        %p176 = pneg %p175
      $region34: #{tpu_custom_call.1} parent=5 // pred_check_branch
        %178 = sbr.rel (%p176) target = $region36
      $region35: #{tpu_custom_call.1} parent=5 // pred_region
        %s179 = ssub.s32 %s13, 2
        // Predicated region
        $region37: #{tpu_custom_call.1} parent=35 // pred_check
          %p180 = pneg %p68
        $region38: #{tpu_custom_call.1} parent=35 // pred_check_branch
          %182 = sbr.rel (%p180) target = $region40
        $region39: #{tpu_custom_call.1} parent=35 // pred_region
          %s183 = sand.u32 %s53, 1
          %s184 = scalar_lea.sflag [#allocation4], %s183
          %s185 = sand.u32 %s53, 1
          %s186 = smul.addr %s185, 16
          %s187 = scalar_lea.vmem [#allocation5], %s186
          %188 = dma.done %s184, 256
        $region40: #{tpu_custom_call.1} parent=35 // pred_fallthru
          _
      $region36: #{tpu_custom_call.1} parent=5 // pred_fallthru
        _
    $region6: #{tpu_custom_call.1} parent=1 // loop_footer
      %s17 = sadd.s32 1, %s13
    $region7: #{tpu_custom_call.1} parent=1 // loop_footer_branch
      %12 = sbr.rel target = $region3
    $region8: #{tpu_custom_call.1} parent=1 // loop_exit
      _
    %189 = vsyncpa [#allocation3], 1
    %s190 = scalar_lea.sflag [#allocation3], 1
    %191 = vsyncpa %s190, 1
    %192 = vsyncpa [#allocation4], 1
    %s193 = scalar_lea.sflag [#allocation4], 1
    %194 = vsyncpa %s193, 1

</llo_original>
